<compile_context>
chip_gen: v7x
topology: tpu7x:2x2x1
jax: 0.10.0
libtpu: 0.0.40
codegen_flags: <defaults>
</compile_context>

<pallas_src>
import jax
import jax.numpy as jnp
from jax import lax
from jax.experimental import pallas as pl
from jax.experimental.pallas import tpu as pltpu


_QSUB = 8  # queries processed per inner sub-block (bounds vreg pressure)


def _round_up(x, m):
    return (x + m - 1) // m * m


# ----------------------------------------------------------------------------
# Kernel 1: fc0 applied to the gallery ("key") features, row-tiled 2-D matmul
# ----------------------------------------------------------------------------
def _fc0_rows_kernel(x_ref, w_ref, b_ref, o_ref):
    # x: [TR, Din] bf16, w: [Dout, Din] bf16, b: [1, Dout] f32 -> o: [TR, Dout] bf16
    y = lax.dot_general(x_ref[...], w_ref[...], (((1,), (1,)), ((), ())),
                        preferred_element_type=jnp.float32)
    o_ref[...] = (y + b_ref[...]).astype(o_ref.dtype)


def fc0_rows(x2d, w_bf16, b_f32, *, tile_rows=512):
    """y = x @ W^T + b over row tiles (x2d: [R, Din] bf16 -> [R, Dout] bf16)."""
    R, Din = x2d.shape
    Dout = w_bf16.shape[0]
    while tile_rows > 8 and R % tile_rows:
        tile_rows //= 2
    assert R % tile_rows == 0
    inv = pl.Buffered(1)          # weight / bias are grid-invariant: single-buffer
    return pl.pallas_call(
        _fc0_rows_kernel,
        out_shape=jax.ShapeDtypeStruct((R, Dout), jnp.bfloat16),
        grid=(R // tile_rows,),
        in_specs=[
            pl.BlockSpec((tile_rows, Din), lambda i: (i, 0)),
            pl.BlockSpec((Dout, Din), lambda i: (0, 0), pipeline_mode=inv),
            pl.BlockSpec((1, Dout), lambda i: (0, 0), pipeline_mode=inv),
        ],
        out_specs=pl.BlockSpec((tile_rows, Dout), lambda i: (i, 0)),
        compiler_params=pltpu.CompilerParams(
            dimension_semantics=("parallel",),
            vmem_limit_bytes=48 * 1024 * 1024),
    )(x2d, w_bf16, b_f32)


# ----------------------------------------------------------------------------
# Kernel 2: fused fc0(query) + gated cross-correlation + max pools + FFN head.
#           Lane dim is always TK; scores computed in per-s chunks.
# ----------------------------------------------------------------------------
def _match_kernel(xq_ref, key_ref, w0_ref, b0_ref, gate_ref,
                  w2s_ref, beta2_ref, w3a_ref, t3_ref, out_ref, qm_ref):
    S, TK, D = key_ref.shape
    TQ = out_ref.shape[0]
    F = w2s_ref.shape[0]
    QSUB = gate_ref.shape[0] // S
    n_sub = TQ // QSUB

    # fc0 on the query tile: computed once per q-tile (the k grid axis is
    # "arbitrary" and iterates fastest), cached in VMEM scratch across ki.
    @pl.when(pl.program_id(1) == 0)
    def _():
        qp = lax.dot_general(xq_ref[...], w0_ref[...], (((1,), (1,)), ((), ())),
                             preferred_element_type=jnp.float32)
        qm_ref[...] = (qp + b0_ref[...]).astype(jnp.bfloat16)

    gate = gate_ref[...]          # [QSUB*S, S] f32 : gate[(q,t), s] = sigmoid(se)[s, t]
    w2s = w2s_ref[...]            # [F, S]  bf16 : fc2 weight * (bn1*bn2 scale) folded
    beta2 = beta2_ref[...]        # [F, 1]  f32  : bn1/fc2-bias/bn2 shift folded
    w3a = w3a_ref[...]            # [F, 1]  f32  : fc3 weight * bn3 scale
    t3 = t3_ref[0]                # scalar       : 2*b3*bn3_scale + bn3_shift

    for qb in range(n_sub):                                    # query sub-blocks of 8
        qm_b = qm_ref[pl.ds(qb * QSUB * S, QSUB * S), :]       # [QSUB*S, D] bf16
        m1 = None
        m2_parts = []
        for s in range(S):                                     # s-chunked score matmul
            ks = key_ref[s]                                    # [TK, D] bf16
            sc = lax.dot_general(qm_b, ks, (((1,), (1,)), ((), ())),
                                 preferred_element_type=jnp.float32)   # [(q,t), k] f32
            sc = sc * gate[:, s:s + 1]                         # gate in f32 (v5e-friendly)
            m1 = sc if m1 is None else jnp.maximum(m1, sc)     # running max over s
            m2_parts.append(jnp.max(sc.reshape(QSUB, S, TK), axis=1))  # max over t
        m1 = m1.reshape(QSUB, S, TK)                           # [q, t, k]
        m2 = jnp.stack(m2_parts, axis=1)                       # [q, s, k]
        # both branches share the same head -> one [F,S]x[S,2*TK] matmul per query
        mm = jnp.concatenate([m1, m2], axis=2).astype(jnp.bfloat16)    # [q, S, 2*TK]

        for q in range(QSUB):                                  # head, one query at a time
            h = lax.dot_general(w2s, mm[q], (((1,), (0,)), ((), ())),
                                preferred_element_type=jnp.float32)    # [F, 2*TK] f32
            h = jnp.maximum(h + beta2, 0.0)                    # folded bn1/fc2b/bn2 + relu
            g = h[:, :TK] + h[:, TK:]                          # sum the two branches
            o = jnp.sum(g * w3a, axis=0, keepdims=True) + t3   # fc3 as weighted F-reduce
            out_ref[pl.ds(qb * QSUB + q, 1), :] = o


# ----------------------------------------------------------------------------
# Wrapper (parameter folding, padding, pallas_call plumbing)
# ----------------------------------------------------------------------------
def tmatcher_forward(q_feat, g_feat, params, *, tile_q=32, tile_k=128):
    """Pallas forward for the TransMatcher TransformerDecoderLayer (eval-mode BN)."""
    Qn, H, W, D = q_feat.shape
    Kn = g_feat.shape[0]
    S = H * W
    assert S == params['seq_len'] and D == params['d_model']
    assert S % 8 == 0, "seq_len (= H*W) must be a multiple of 8 (sublane tiling)"
    assert tile_q % _QSUB == 0 and tile_k % 128 == 0

    F = params['w2'].shape[0]

    # ---- hoisted / folded parameters (computed once, outside the grid) -----
    w0b = params['w0'].astype(jnp.bfloat16)                    # fc0 weight (MXU operand)
    b0 = params['b0'].reshape(1, D).astype(jnp.float32)

    gate = jax.nn.sigmoid(params['score_embed']).astype(jnp.float32)   # [s, t]
    gate_cols = jnp.tile(gate.T, (_QSUB, 1))                   # [(q,t), s], q-tiled

    a1, c1 = params['bn1_scale'], params['bn1_shift']
    a2, c2 = params['bn2_scale'], params['bn2_shift']
    a3, c3 = params['bn3_scale'], params['bn3_shift']
    w2 = params['w2'].astype(jnp.float32)                      # [F, S]
    w2s = (w2 * (a1 * a2)[..., None]).astype(jnp.bfloat16)     # fc2 W * bn1*bn2 scale
    beta2 = (a2 * (c1 * jnp.sum(w2, axis=1) + params['b2']) + c2)
    beta2 = beta2.reshape(F, 1).astype(jnp.float32)
    w3a = (params['w3'][0] * a3).reshape(F, 1).astype(jnp.float32)
    t3 = (2.0 * a3 * params['b3'][0] + c3).reshape(1).astype(jnp.float32)

    # ---- pad Q and K so every block is sublane/lane aligned -----------------
    Qp = _round_up(Qn, tile_q)
    Kp = _round_up(Kn, tile_k)                                 # lane-dense output columns

    xq = jnp.pad(q_feat.reshape(Qn, S, D).astype(jnp.bfloat16),
                 ((0, Qp - Qn), (0, 0), (0, 0))).reshape(Qp * S, D)
    xg = jnp.pad(g_feat.reshape(Kn, S, D).astype(jnp.bfloat16),
                 ((0, Kp - Kn), (0, 0), (0, 0)))
    xg_sd = jnp.transpose(xg, (1, 0, 2)).reshape(S * Kp, D)    # s-major key rows

    # fc0 on the gallery features once (keys are reused by every query tile).
    keys = fc0_rows(xg_sd, w0b, b0).reshape(S, Kp, D)          # [S, Kp, D] bf16

    # TODO(synk): if production d_model < 128, pack the trailing dim of the
    # query/key blocks to be lane-dense; with the demo D=32 blocks are lane-sparse.
    inv = pl.Buffered(1)       # grid-invariant operands: no double buffering
    out = pl.pallas_call(
        _match_kernel,
        out_shape=jax.ShapeDtypeStruct((Qp, Kp), jnp.float32),
        grid=(Qp // tile_q, Kp // tile_k),
        in_specs=[
            pl.BlockSpec((tile_q * S, D), lambda qi, ki: (qi, 0)),                 # raw queries
            pl.BlockSpec((S, tile_k, D), lambda qi, ki: (0, ki, 0)),               # projected keys
            pl.BlockSpec((D, D), lambda qi, ki: (0, 0), pipeline_mode=inv),        # fc0 W (bf16)
            pl.BlockSpec((1, D), lambda qi, ki: (0, 0), pipeline_mode=inv),        # fc0 b
            pl.BlockSpec((_QSUB * S, S), lambda qi, ki: (0, 0), pipeline_mode=inv),# gate columns
            pl.BlockSpec((F, S), lambda qi, ki: (0, 0), pipeline_mode=inv),        # fc2 W * alpha2
            pl.BlockSpec((F, 1), lambda qi, ki: (0, 0), pipeline_mode=inv),        # beta2
            pl.BlockSpec((F, 1), lambda qi, ki: (0, 0), pipeline_mode=inv),        # fc3 W * bn3
            pl.BlockSpec(memory_space=pltpu.MemorySpace.SMEM),                     # t3 scalar
        ],
        out_specs=pl.BlockSpec((tile_q, tile_k), lambda qi, ki: (qi, ki)),
        scratch_shapes=[pltpu.VMEM((tile_q * S, D), jnp.bfloat16)],                # cached fc0(q)
        compiler_params=pltpu.CompilerParams(
            # q axis parallel (megacore); k axis arbitrary so the fc0(query)
            # scratch computed at ki==0 is valid for all subsequent ki.
            dimension_semantics=("parallel", "arbitrary"),
            vmem_limit_bytes=48 * 1024 * 1024),   # headroom on v7x's 64 MiB VMEM
    )(xq, keys, w0b, b0, gate_cols, w2s, beta2, w3a, t3)

    return out[:Qn, :Kn]


# ----------------------------------------------------------------------------
# Pure-JAX references
# ----------------------------------------------------------------------------
def tmatcher_reference(q_feat, g_feat, p):
    """Faithful f32 port of the PyTorch forward (eval-mode BatchNorm)."""
    Qn, H, W, D = q_feat.shape
    Kn = g_feat.shape[0]
    S = H * W
    tgt = q_feat.reshape(Qn, S, D)
    mem = g_feat.reshape(Kn, S, D)
    query = tgt @ p['w0'].T + p['b0']
    key = mem @ p['w0'].T + p['b0']                            # module uses fc0 for both
    score = jnp.einsum('qtd,ksd->qkst', query, key)
    score = score * jax.nn.sigmoid(p['score_embed'])[None, None]
    score = score.reshape(Qn * Kn, S, S)
    v = jnp.concatenate([score.max(axis=1), score.max(axis=2)], axis=-1)
    v = v.reshape(-1, S)                                       # [2*Q*K, S]
    v = v * p['bn1_scale'] + p['bn1_shift']                    # bn1 (eval)
    h = v @ p['w2'].T + p['b2']
    h = h * p['bn2_scale'] + p['bn2_shift']                    # bn2 (eval)
    h = jnp.maximum(h, 0.0)
    o = h @ p['w3'].T + p['b3']                                # [2*Q*K, 1]
    o = o.reshape(-1, 2).sum(axis=-1, keepdims=True)           # sum the two branches
    o = o * p['bn3_scale'] + p['bn3_shift']                    # bn3 (eval)
    return o.reshape(Qn, Kn)


def tmatcher_reference_folded(q_feat, g_feat, p):
    """Precision-matched mirror of the kernel (bf16 MXU operands, folded BN)."""
    Qn, H, W, D = q_feat.shape
    Kn = g_feat.shape[0]
    S = H * W
    w0b = p['w0'].astype(jnp.bfloat16)
    tgt = q_feat.reshape(Qn, S, D).astype(jnp.bfloat16)
    mem = g_feat.reshape(Kn, S, D).astype(jnp.bfloat16)
    query = (jnp.einsum('qtd,ed->qte', tgt, w0b,
                        preferred_element_type=jnp.float32) + p['b0']).astype(jnp.bfloat16)
    key = (jnp.einsum('ksd,ed->kse', mem, w0b,
                      preferred_element_type=jnp.float32) + p['b0']).astype(jnp.bfloat16)
    score = jnp.einsum('qtd,ksd->qkst', query, key, preferred_element_type=jnp.float32)
    score = score * jax.nn.sigmoid(p['score_embed'])[None, None]
    m1 = score.max(axis=2)                                     # over s -> [q, k, t]
    m2 = score.max(axis=3)                                     # over t -> [q, k, s]
    a1, c1 = p['bn1_scale'], p['bn1_shift']
    a2, c2 = p['bn2_scale'], p['bn2_shift']
    a3, c3 = p['bn3_scale'], p['bn3_shift']
    w2 = p['w2']
    w2s = (w2 * (a1 * a2)[..., None]).astype(jnp.bfloat16)
    beta2 = a2 * (c1 * jnp.sum(w2, axis=1) + p['b2']) + c2
    w3a = p['w3'][0] * a3
    t3 = 2.0 * a3 * p['b3'][0] + c3

    def head(m):
        h = jnp.einsum('qks,fs->qkf', m.astype(jnp.bfloat16), w2s,
                       preferred_element_type=jnp.float32) + beta2
        return jnp.maximum(h, 0.0)

    g = head(m1) + head(m2)
    return jnp.einsum('qkf,f->qk', g, w3a) + t3


# ----------------------------------------------------------------------------
# Deterministic parameter construction + demo
# ----------------------------------------------------------------------------
def make_params(key, seq_len, d_model, dim_ff):
    ks = jax.random.split(key, 10)
    eps = 1e-5

    def uni(k, shape, fan_in):
        bound = 1.0 / jnp.sqrt(jnp.float32(fan_in))
        return jax.random.uniform(k, shape, jnp.float32, -bound, bound)

    se = jax.random.normal(ks[0], (seq_len, seq_len), jnp.float32)
    se = se + se.T                                             # score_embed init

    w0 = uni(ks[1], (d_model, d_model), d_model)
    b0 = uni(ks[2], (d_model,), d_model)
    # NOTE: fc1 exists in the module's __init__ but is never used by forward().
    w2 = uni(ks[3], (dim_ff, seq_len), seq_len)
    b2 = uni(ks[4], (dim_ff,), seq_len)
    w3 = uni(ks[5], (1, dim_ff), dim_ff)
    b3 = uni(ks[6], (1,), dim_ff)

    def bn_affine(k, n):     # eval-mode BN with mildly randomized running stats
        kg, kb, km, kv = jax.random.split(k, 4)
        gamma = 1.0 + 0.2 * jax.random.normal(kg, (n,), jnp.float32)
        beta = 0.2 * jax.random.normal(kb, (n,), jnp.float32)
        rmean = 0.2 * jax.random.normal(km, (n,), jnp.float32)
        rvar = 1.0 + 0.2 * jax.random.uniform(kv, (n,), jnp.float32)
        scale = gamma / jnp.sqrt(rvar + eps)
        shift = beta - rmean * scale
        return scale, shift

    bn1_s, bn1_t = bn_affine(ks[7], 1)
    bn2_s, bn2_t = bn_affine(ks[8], dim_ff)
    bn3_s, bn3_t = bn_affine(ks[9], 1)

    return dict(seq_len=seq_len, d_model=d_model, score_embed=se,
                w0=w0, b0=b0, w2=w2, b2=b2, w3=w3, b3=b3,
                bn1_scale=bn1_s[0], bn1_shift=bn1_t[0],
                bn2_scale=bn2_s, bn2_shift=bn2_t,
                bn3_scale=bn3_s[0], bn3_shift=bn3_t[0])


if __name__ == "__main__":
    # small but non-trivial shapes: 12 query images, 6 gallery images,
    # feature map 2x4 (seq_len = 8), d_model = 32, dim_feedforward = 64.
    Qn, Kn, H, W = 12, 6, 2, 4
    D, F = 32, 64
    S = H * W

    key = jax.random.PRNGKey(0)
    kq, kg, kp = jax.random.split(key, 3)
    q_feat = jax.random.normal(kq, (Qn, H, W, D), jnp.float32)
    g_feat = jax.random.normal(kg, (Kn, H, W, D), jnp.float32)
    params = make_params(kp, S, D, F)

    out = tmatcher_forward(q_feat, g_feat, params, tile_q=32, tile_k=128)
    out = jax.block_until_ready(out)
    assert out.shape == (Qn, Kn)

    # precision-matched reference (bf16 MXU operands, same folding): tight check
    ref_m = tmatcher_reference_folded(q_feat, g_feat, params)
    scale_m = float(jnp.max(jnp.abs(ref_m)))
    err_m = float(jnp.max(jnp.abs(out - ref_m)))
    assert err_m <= 2e-2 * (1.0 + scale_m), (err_m, scale_m)

    # faithful f32 module: loose check (matmul operands are bf16 on the MXU)
    ref_f = tmatcher_reference(q_feat, g_feat, params)
    scale_f = float(jnp.max(jnp.abs(ref_f)))
    err_f = float(jnp.max(jnp.abs(out - ref_f)))
    assert err_f <= 8e-2 * (1.0 + scale_f), (err_f, scale_f)

    print("KERNEL_OK")
</pallas_src>

<mosaic_0001>
module attributes {stable_mosaic.version = 11 : i64} {
  func.func @_fc0_rows_kernel(%arg0: i32, %arg1: memref<512x32xbf16, #tpu.memory_space<vmem>>, %arg2: memref<32x32xbf16, #tpu.memory_space<vmem>>, %arg3: memref<1x32xf32, #tpu.memory_space<vmem>>, %arg4: memref<512x32xbf16, #tpu.memory_space<vmem>>) attributes {dimension_semantics = [#tpu.dimension_semantics<parallel>], iteration_bounds = array<i64: 2>, scalar_prefetch = 0 : i64, scratch_operands = 0 : i64, tpu.core_type = #tpu.core_type<tc>, window_params = [{transform_indices = @transform_0, window_bounds = array<i64: 512, 32>}, {pipeline_mode = #tpu.pipeline_mode<synchronous>, transform_indices = @transform_1, window_bounds = array<i64: 32, 32>}, {pipeline_mode = #tpu.pipeline_mode<synchronous>, transform_indices = @transform_2, window_bounds = array<i64: 1, 32>}, {transform_indices = @transform_3, window_bounds = array<i64: 512, 32>}]} {
    %c0 = arith.constant 0 : index
    %c0_0 = arith.constant 0 : index
    %0 = vector.load %arg1[%c0, %c0_0] : memref<512x32xbf16, #tpu.memory_space<vmem>>, vector<512x32xbf16>
    %c0_1 = arith.constant 0 : index
    %c0_2 = arith.constant 0 : index
    %1 = vector.load %arg2[%c0_1, %c0_2] : memref<32x32xbf16, #tpu.memory_space<vmem>>, vector<32x32xbf16>
    %cst = arith.constant dense<0.000000e+00> : vector<512x32xf32>
    %2 = tpu.matmul %0, %1, %cst {dimension_numbers = #tpu.dot_dimension_numbers<[1], [1], [0], [0], [0, 0, 1, 0], [], []>} : vector<512x32xbf16>, vector<32x32xbf16>, vector<512x32xf32> -> vector<512x32xf32>
    %c0_3 = arith.constant 0 : index
    %c0_4 = arith.constant 0 : index
    %3 = vector.load %arg3[%c0_3, %c0_4] : memref<1x32xf32, #tpu.memory_space<vmem>>, vector<1x32xf32>
    %4 = vector.broadcast %3 : vector<1x32xf32> to vector<512x32xf32>
    %5 = arith.addf %2, %4 : vector<512x32xf32>
    %6 = arith.truncf %5 : vector<512x32xf32> to vector<512x32xbf16>
    %c0_5 = arith.constant 0 : index
    %c0_6 = arith.constant 0 : index
    %7 = vector.load %arg4[%c0_5, %c0_6] : memref<512x32xbf16, #tpu.memory_space<vmem>>, vector<512x32xbf16>
    tpu.vector_store %arg4[%c0_5, %c0_6], %6 {strides = array<i32>} : memref<512x32xbf16, #tpu.memory_space<vmem>>, vector<512x32xbf16>,
    return
  }
  func.func @transform_0(%arg0: i32) -> (i32, i32) {
    %c0_i32 = arith.constant 0 : i32
    %c0_i32_0 = arith.constant 0 : i32
    return %arg0, %c0_i32 : i32, i32
  }
  func.func @transform_1(%arg0: i32) -> (i32, i32) {
    %c0_i32 = arith.constant 0 : i32
    %c0_i32_0 = arith.constant 0 : i32
    %c0_i32_1 = arith.constant 0 : i32
    return %c0_i32, %c0_i32_0 : i32, i32
  }
  func.func @transform_2(%arg0: i32) -> (i32, i32) {
    %c0_i32 = arith.constant 0 : i32
    %c0_i32_0 = arith.constant 0 : i32
    %c0_i32_1 = arith.constant 0 : i32
    return %c0_i32, %c0_i32_0 : i32, i32
  }
  func.func @transform_3(%arg0: i32) -> (i32, i32) {
    %c0_i32 = arith.constant 0 : i32
    %c0_i32_0 = arith.constant 0 : i32
    return %arg0, %c0_i32 : i32, i32
  }
}

</mosaic_0001>

<llo_original>
// kernel: tpu_custom_call.1
$region0: #{tpu_custom_call.1}
  #allocation0 [shape = 'u32[]', space=smem, size = 0x4, offset = 0x4, fixed_abs, tag = 'smem constant byte address 0x4 - core index']
  #allocation1 [shape = 'u32[144,128]{1,0:T(1,128)}', space=vmem, size = 0x12000, scoped, tag = 'internal scratch']
  %s0 = inlined_call_operand.vmem [shape: bf16[1024,32], index: 0, kind: input, shape index: {}]
  %s1 = inlined_call_operand.vmem [shape: bf16[32,32], index: 1, kind: input, shape index: {}]
  %s2 = inlined_call_operand.vmem [shape: f32[1,32], index: 2, kind: input, shape index: {}]
  %s3 = inlined_call_operand.vmem [shape: bf16[1024,32], index: 3, kind: output, shape index: {}]
  %s4 = sld [smem:[#allocation0]]
  $region45: #{tpu_custom_call.1} parent=0
    _
  %s6 = ssub.s32 1, %s4
  %s7 = scalar_select 0, %s6, %s4
  loop: start=0, step=1, limit=4
  $region2: #{tpu_custom_call.1} parent=0 // loop_pre_header
    _
  $region3: #{tpu_custom_call.1} parent=0 // loop_header
    %s9 = sphi 0, %s13
    %p10 = scmp.ge.s32.totalorder %s9, 4
    %s19 = sphi 0, %s21
    %s22 = sphi 0, %s19
    %s23 = sphi 0, %s22
    %s39 = sphi 0, %s23
    %s43 = sphi 0, %s43
    %s45 = sphi 0, %s43
    %s46 = sphi 0, %s45
    %s60 = sphi 0, %s46
    %s64 = sphi 0, %s64
    %s66 = sphi 0, %s64
    %s67 = sphi 0, %s66
    %s81 = sphi 0, %s67
    %s87 = sphi 0, %s89
    %s90 = sphi 0, %s87
    %s91 = sphi 0, %s90
    %s107 = sphi 0, %s91
  $region4: #{tpu_custom_call.1} parent=0 // loop_header_branch
    %12 = sbr.rel (%p10) target = $region8
  $region5: #{tpu_custom_call.1} parent=0 // loop_body
    %s14 = ssub.s32 %s9, 1
    %s15 = ssub.s32 %s9, 2
    %s16 = sadd.s32 %s9, 1
    %s17 = ssub.s32 %s9, %s16
    %p18 = scmp.eq.s32.totalorder %s17, 0
    %s20 = sadd.s32 %s19, 1
    %s21 = scalar_select %p18, %s19, %s20
    %p24 = pneg %p18
    %p25 = scmp.eq.s32.totalorder %s9, 1
    %p26 = por %p24, %p25
    %p27 = scmp.ne.s32.totalorder %s19, %s22
    %p28 = scmp.eq.s32.totalorder %s9, 0
    %p29 = por %p27, %p28
    %p30 = scmp.ne.s32.totalorder %s19, %s22
    %p31 = scmp.eq.s32.totalorder %s14, 1
    %p32 = por %p30, %p31
    %p33 = scmp.ne.s32.totalorder %s22, %s23
    %p34 = scmp.eq.s32.totalorder %s14, 0
    %p35 = por %p33, %p34
    %p36 = scmp.ne.s32.totalorder %s22, %s23
    %p37 = scmp.eq.s32.totalorder %s15, 1
    %p38 = por %p36, %p37
    %p40 = scmp.ne.s32.totalorder %s23, %s39
    %p41 = scmp.eq.s32.totalorder %s15, 0
    %p42 = por %p40, %p41
    %s44 = sadd.s32 %s43, 1
    %p47 = scmp.eq.s32.totalorder %s9, 1
    %p48 = scmp.ne.s32.totalorder %s43, %s45
    %p49 = scmp.eq.s32.totalorder %s9, 0
    %p50 = por %p48, %p49
    %p51 = scmp.ne.s32.totalorder %s43, %s45
    %p52 = scmp.eq.s32.totalorder %s14, 1
    %p53 = por %p51, %p52
    %p54 = scmp.ne.s32.totalorder %s45, %s46
    %p55 = scmp.eq.s32.totalorder %s14, 0
    %p56 = por %p54, %p55
    %p57 = scmp.ne.s32.totalorder %s45, %s46
    %p58 = scmp.eq.s32.totalorder %s15, 1
    %p59 = por %p57, %p58
    %p61 = scmp.ne.s32.totalorder %s46, %s60
    %p62 = scmp.eq.s32.totalorder %s15, 0
    %p63 = por %p61, %p62
    %s65 = sadd.s32 %s64, 1
    %p68 = scmp.eq.s32.totalorder %s9, 1
    %p69 = scmp.ne.s32.totalorder %s64, %s66
    %p70 = scmp.eq.s32.totalorder %s9, 0
    %p71 = por %p69, %p70
    %p72 = scmp.ne.s32.totalorder %s64, %s66
    %p73 = scmp.eq.s32.totalorder %s14, 1
    %p74 = por %p72, %p73
    %p75 = scmp.ne.s32.totalorder %s66, %s67
    %p76 = scmp.eq.s32.totalorder %s14, 0
    %p77 = por %p75, %p76
    %p78 = scmp.ne.s32.totalorder %s66, %s67
    %p79 = scmp.eq.s32.totalorder %s15, 1
    %p80 = por %p78, %p79
    %p82 = scmp.ne.s32.totalorder %s67, %s81
    %p83 = scmp.eq.s32.totalorder %s15, 0
    %p84 = por %p82, %p83
    %s85 = ssub.s32 %s9, %s16
    %p86 = scmp.eq.s32.totalorder %s85, 0
    %s88 = sadd.s32 %s87, 1
    %s89 = scalar_select %p86, %s87, %s88
    %p92 = pneg %p86
    %p93 = scmp.eq.s32.totalorder %s9, 1
    %p94 = por %p92, %p93
    %p95 = scmp.ne.s32.totalorder %s87, %s90
    %p96 = scmp.eq.s32.totalorder %s9, 0
    %p97 = por %p95, %p96
    %p98 = scmp.ne.s32.totalorder %s87, %s90
    %p99 = scmp.eq.s32.totalorder %s14, 1
    %p100 = por %p98, %p99
    %p101 = scmp.ne.s32.totalorder %s90, %s91
    %p102 = scmp.eq.s32.totalorder %s14, 0
    %p103 = por %p101, %p102
    %p104 = scmp.ne.s32.totalorder %s90, %s91
    %p105 = scmp.eq.s32.totalorder %s15, 1
    %p106 = por %p104, %p105
    %p108 = scmp.ne.s32.totalorder %s91, %s107
    %p109 = scmp.eq.s32.totalorder %s15, 0
    %p110 = por %p108, %p109
    %p111 = scmp.le.s32.totalorder 1, %s9
    %p112 = scmp.lt.s32.totalorder %s9, 3
    %p113 = pnand %p111, %p112
    %p114 = pneg %p113
    // Predicated region
    $region9: #{tpu_custom_call.1} parent=5 // pred_check
      _
    $region10: #{tpu_custom_call.1} parent=5 // pred_check_branch
      %116 = sbr.rel (%p113) target = $region12
    $region11: #{tpu_custom_call.1} parent=5 // pred_region
      %s117 = ssub.s32 %s9, 1
      // Predicated region
      $region13: #{tpu_custom_call.1} parent=11 // pred_check
        %p118 = pneg %p56
      $region14: #{tpu_custom_call.1} parent=11 // pred_check_branch
        %120 = sbr.rel (%p118) target = $region16
      $region15: #{tpu_custom_call.1} parent=11 // pred_region
        _
      $region16: #{tpu_custom_call.1} parent=11 // pred_fallthru
        _
      // Predicated region
      $region17: #{tpu_custom_call.1} parent=11 // pred_check
        %p121 = pneg %p77
      $region18: #{tpu_custom_call.1} parent=11 // pred_check_branch
        %123 = sbr.rel (%p121) target = $region20
      $region19: #{tpu_custom_call.1} parent=11 // pred_region
        _
      $region20: #{tpu_custom_call.1} parent=11 // pred_fallthru
        _
    $region12: #{tpu_custom_call.1} parent=5 // pred_fallthru
      _
    %p124 = scmp.lt.s32.totalorder %s9, 2
    // Predicated region
    $region21: #{tpu_custom_call.1} parent=5 // pred_check
      %p125 = pneg %p124
    $region22: #{tpu_custom_call.1} parent=5 // pred_check_branch
      %127 = sbr.rel (%p125) target = $region24
    $region23: #{tpu_custom_call.1} parent=5 // pred_region
      // Predicated region
      $region25: #{tpu_custom_call.1} parent=23 // pred_check
        %p128 = pneg %p29
      $region26: #{tpu_custom_call.1} parent=23 // pred_check_branch
        %130 = sbr.rel (%p128) target = $region28
      $region27: #{tpu_custom_call.1} parent=23 // pred_region
        %s131 = smul.u32 64, %s9
        %p132 = scmp.lt.s32.totalorder %s131, 127
        %s133 = scalar_select %p132, %s131, 127
        %s134 = smul.addr %s133, 4
        %s135 = scalar_lea.vmem %s0, %s134
        %s136 = smul.u32 64, %s9
      $region28: #{tpu_custom_call.1} parent=23 // pred_fallthru
        _
    $region24: #{tpu_custom_call.1} parent=5 // pred_fallthru
      _
    %p137 = scmp.le.s32.totalorder 1, %s9
    %p138 = scmp.lt.s32.totalorder %s9, 3
    %p139 = pnand %p137, %p138
    %p140 = pneg %p139
    // Predicated region
    $region29: #{tpu_custom_call.1} parent=5 // pred_check
      _
    $region30: #{tpu_custom_call.1} parent=5 // pred_check_branch
      %142 = sbr.rel (%p139) target = $region32
    $region31: #{tpu_custom_call.1} parent=5 // pred_region
      %s143 = ssub.s32 %s9, 1
      %s144 = smul.u32 64, %s14
      %p145 = scmp.lt.s32.totalorder %s144, 127
      %s146 = scalar_select %p145, %s144, 127
      %s147 = smul.addr %s146, 4
      %s148 = scalar_lea.vmem %s0, %s147
      %p149 = pneg %p35
      %p150 = pneg %p32
      %p151 = pneg %p56
      %p152 = pneg %p53
      %p153 = pneg %p77
      %p154 = pneg %p74
      %p155 = pneg %p103
      %p156 = pneg %p100
      %s157 = smul.u32 64, %s14
      %p158 = scmp.lt.s32.totalorder %s157, 127
      %s159 = scalar_select %p158, %s157, 127
      %s160 = smul.addr %s159, 4
      %s161 = scalar_lea.vmem %s3, %s160
      %s162 = smul.u32 64, %s14
      %p163 = scmp.lt.s32.totalorder %s162, 127
      %s164 = scalar_select %p163, %s162, 127
      %s165 = smul.addr %s164, 4
      %s166 = scalar_lea.vmem %s0, %s165
      %s167 = smul.u32 64, %s14
      %s168 = smul.u32 64, %s14
      %p169 = scmp.lt.s32.totalorder %s168, 127
      %s170 = scalar_select %p169, %s168, 127
      %s171 = smul.addr %s170, 4
      %s172 = scalar_lea.vmem %s3, %s171
      %s173 = smul.u32 64, %s14
      %v175 = vld [vmem:[%s166] sm:$0xf]
      %v176 = vld [vmem:[%s166 + $0x4] sm:$0xf]
      %v177 = vld [vmem:[%s166 + $0x8] sm:$0xf]
      %v178 = vld [vmem:[%s166 + $0xc] sm:$0xf]
      %v179 = vld [vmem:[%s166 + $0x10] sm:$0xf]
      %v180 = vld [vmem:[%s166 + $0x14] sm:$0xf]
      %v181 = vld [vmem:[%s166 + $0x18] sm:$0xf]
      %v182 = vld [vmem:[%s166 + $0x1c] sm:$0xf]
      %v183 = vld [vmem:[%s166 + $0x20] sm:$0xf]
      %v184 = vld [vmem:[%s166 + $0x24] sm:$0xf]
      %v185 = vld [vmem:[%s166 + $0x28] sm:$0xf]
      %v186 = vld [vmem:[%s166 + $0x2c] sm:$0xf]
      %v187 = vld [vmem:[%s166 + $0x30] sm:$0xf]
      %v188 = vld [vmem:[%s166 + $0x34] sm:$0xf]
      %v189 = vld [vmem:[%s166 + $0x38] sm:$0xf]
      %v190 = vld [vmem:[%s166 + $0x3c] sm:$0xf]
      %v191 = vld [vmem:[%s166 + $0x40] sm:$0xf]
      %v192 = vld [vmem:[%s166 + $0x44] sm:$0xf]
      %v193 = vld [vmem:[%s166 + $0x48] sm:$0xf]
      %v194 = vld [vmem:[%s166 + $0x4c] sm:$0xf]
      %v195 = vld [vmem:[%s166 + $0x50] sm:$0xf]
      %v196 = vld [vmem:[%s166 + $0x54] sm:$0xf]
      %v197 = vld [vmem:[%s166 + $0x58] sm:$0xf]
      %v198 = vld [vmem:[%s166 + $0x5c] sm:$0xf]
      %v199 = vld [vmem:[%s166 + $0x60] sm:$0xf]
      %v200 = vld [vmem:[%s166 + $0x64] sm:$0xf]
      %v201 = vld [vmem:[%s166 + $0x68] sm:$0xf]
      %v202 = vld [vmem:[%s166 + $0x6c] sm:$0xf]
      %v203 = vld [vmem:[%s166 + $0x70] sm:$0xf]
      %v204 = vld [vmem:[%s166 + $0x74] sm:$0xf]
      %v205 = vld [vmem:[%s166 + $0x78] sm:$0xf]
      %v206 = vld [vmem:[%s166 + $0x7c] sm:$0xf]
      %v207 = vld [vmem:[%s166 + $0x80] sm:$0xf]
      %v208 = vld [vmem:[%s166 + $0x84] sm:$0xf]
      %v209 = vld [vmem:[%s166 + $0x88] sm:$0xf]
      %v210 = vld [vmem:[%s166 + $0x8c] sm:$0xf]
      %v211 = vld [vmem:[%s166 + $0x90] sm:$0xf]
      %v212 = vld [vmem:[%s166 + $0x94] sm:$0xf]
      %v213 = vld [vmem:[%s166 + $0x98] sm:$0xf]
      %v214 = vld [vmem:[%s166 + $0x9c] sm:$0xf]
      %v215 = vld [vmem:[%s166 + $0xa0] sm:$0xf]
      %v216 = vld [vmem:[%s166 + $0xa4] sm:$0xf]
      %v217 = vld [vmem:[%s166 + $0xa8] sm:$0xf]
      %v218 = vld [vmem:[%s166 + $0xac] sm:$0xf]
      %v219 = vld [vmem:[%s166 + $0xb0] sm:$0xf]
      %v220 = vld [vmem:[%s166 + $0xb4] sm:$0xf]
      %v221 = vld [vmem:[%s166 + $0xb8] sm:$0xf]
      %v222 = vld [vmem:[%s166 + $0xbc] sm:$0xf]
      %v223 = vld [vmem:[%s166 + $0xc0] sm:$0xf]
      %v224 = vld [vmem:[%s166 + $0xc4] sm:$0xf]
      %v225 = vld [vmem:[%s166 + $0xc8] sm:$0xf]
      %v226 = vld [vmem:[%s166 + $0xcc] sm:$0xf]
      %v227 = vld [vmem:[%s166 + $0xd0] sm:$0xf]
      %v228 = vld [vmem:[%s166 + $0xd4] sm:$0xf]
      %v229 = vld [vmem:[%s166 + $0xd8] sm:$0xf]
      %v230 = vld [vmem:[%s166 + $0xdc] sm:$0xf]
      %v231 = vld [vmem:[%s166 + $0xe0] sm:$0xf]
      %v232 = vld [vmem:[%s166 + $0xe4] sm:$0xf]
      %v233 = vld [vmem:[%s166 + $0xe8] sm:$0xf]
      %v234 = vld [vmem:[%s166 + $0xec] sm:$0xf]
      %v235 = vld [vmem:[%s166 + $0xf0] sm:$0xf]
      %v236 = vld [vmem:[%s166 + $0xf4] sm:$0xf]
      %v237 = vld [vmem:[%s166 + $0xf8] sm:$0xf]
      %v238 = vld [vmem:[%s166 + $0xfc] sm:$0xf]
      %v239 = vld [vmem:[%s1] sm:$0xf]
      %v240 = vld [vmem:[%s1 + $0x4] sm:$0xf]
      %v241 = vld [vmem:[%s1 + $0x8] sm:$0xf]
      %v242 = vld [vmem:[%s1 + $0xc] sm:$0xf]
      %v243 = vld [vmem:[%s2] sm:$0x1]
      %v245 = vlaneseq
      %v246 = vshrl.u32 %v245, 7
      %v247 = vsub.s32 0, %v246
      %v248 = vrot.slane %v243, %v247
      %v314 = vunpack.c.l.b16 %v175
      %v315 = vunpack.c.l.b16 %v176
      %v316 = vunpack.c.l.b16 %v177
      %v317 = vunpack.c.l.b16 %v178
      %v318 = vunpack.c.l.b16 %v179
      %v319 = vunpack.c.l.b16 %v180
      %v320 = vunpack.c.l.b16 %v181
      %v321 = vunpack.c.l.b16 %v182
      %v322 = vunpack.c.l.b16 %v183
      %v323 = vunpack.c.l.b16 %v184
      %v324 = vunpack.c.l.b16 %v185
      %v325 = vunpack.c.l.b16 %v186
      %v326 = vunpack.c.l.b16 %v187
      %v327 = vunpack.c.l.b16 %v188
      %v328 = vunpack.c.l.b16 %v189
      %v329 = vunpack.c.l.b16 %v190
      %v330 = vunpack.c.l.b16 %v191
      %v331 = vunpack.c.l.b16 %v192
      %v332 = vunpack.c.l.b16 %v193
      %v333 = vunpack.c.l.b16 %v194
      %v334 = vunpack.c.l.b16 %v195
      %v335 = vunpack.c.l.b16 %v196
      %v336 = vunpack.c.l.b16 %v197
      %v337 = vunpack.c.l.b16 %v198
      %v338 = vunpack.c.l.b16 %v199
      %v339 = vunpack.c.l.b16 %v200
      %v340 = vunpack.c.l.b16 %v201
      %v341 = vunpack.c.l.b16 %v202
      %v342 = vunpack.c.l.b16 %v203
      %v343 = vunpack.c.l.b16 %v204
      %v344 = vunpack.c.l.b16 %v205
      %v345 = vunpack.c.l.b16 %v206
      %v346 = vunpack.c.l.b16 %v207
      %v347 = vunpack.c.l.b16 %v208
      %v348 = vunpack.c.l.b16 %v209
      %v349 = vunpack.c.l.b16 %v210
      %v350 = vunpack.c.l.b16 %v211
      %v351 = vunpack.c.l.b16 %v212
      %v352 = vunpack.c.l.b16 %v213
      %v353 = vunpack.c.l.b16 %v214
      %v354 = vunpack.c.l.b16 %v215
      %v355 = vunpack.c.l.b16 %v216
      %v356 = vunpack.c.l.b16 %v217
      %v357 = vunpack.c.l.b16 %v218
      %v358 = vunpack.c.l.b16 %v219
      %v359 = vunpack.c.l.b16 %v220
      %v360 = vunpack.c.l.b16 %v221
      %v361 = vunpack.c.l.b16 %v222
      %v362 = vunpack.c.l.b16 %v223
      %v363 = vunpack.c.l.b16 %v224
      %v364 = vunpack.c.l.b16 %v225
      %v365 = vunpack.c.l.b16 %v226
      %v366 = vunpack.c.l.b16 %v227
      %v367 = vunpack.c.l.b16 %v228
      %v368 = vunpack.c.l.b16 %v229
      %v369 = vunpack.c.l.b16 %v230
      %v370 = vunpack.c.l.b16 %v231
      %v371 = vunpack.c.l.b16 %v232
      %v372 = vunpack.c.l.b16 %v233
      %v373 = vunpack.c.l.b16 %v234
      %v374 = vunpack.c.l.b16 %v235
      %v375 = vunpack.c.l.b16 %v236
      %v376 = vunpack.c.l.b16 %v237
      %v377 = vunpack.c.l.b16 %v238
      %v378 = vpack.c.b16 %v315, %v314
      %v379 = vpack.c.b16 %v317, %v316
      %v380 = vpack.c.b16 %v319, %v318
      %v381 = vpack.c.b16 %v321, %v320
      %v382 = vpack.c.b16 %v323, %v322
      %v383 = vpack.c.b16 %v325, %v324
      %v384 = vpack.c.b16 %v327, %v326
      %v385 = vpack.c.b16 %v329, %v328
      %v386 = vpack.c.b16 %v331, %v330
      %v387 = vpack.c.b16 %v333, %v332
      %v388 = vpack.c.b16 %v335, %v334
      %v389 = vpack.c.b16 %v337, %v336
      %v390 = vpack.c.b16 %v339, %v338
      %v391 = vpack.c.b16 %v341, %v340
      %v392 = vpack.c.b16 %v343, %v342
      %v393 = vpack.c.b16 %v345, %v344
      %v394 = vpack.c.b16 %v347, %v346
      %v395 = vpack.c.b16 %v349, %v348
      %v396 = vpack.c.b16 %v351, %v350
      %v397 = vpack.c.b16 %v353, %v352
      %v398 = vpack.c.b16 %v355, %v354
      %v399 = vpack.c.b16 %v357, %v356
      %v400 = vpack.c.b16 %v359, %v358
      %v401 = vpack.c.b16 %v361, %v360
      %v402 = vpack.c.b16 %v363, %v362
      %v403 = vpack.c.b16 %v365, %v364
      %v404 = vpack.c.b16 %v367, %v366
      %v405 = vpack.c.b16 %v369, %v368
      %v406 = vpack.c.b16 %v371, %v370
      %v407 = vpack.c.b16 %v373, %v372
      %v408 = vpack.c.b16 %v375, %v374
      %v409 = vpack.c.b16 %v377, %v376
      %v414 = vunpack.c.l.b16 %v239
      %v415 = vunpack.c.l.b16 %v240
      %v416 = vunpack.c.l.b16 %v241
      %v417 = vunpack.c.l.b16 %v242
      %v418 = vpack.c.b16 %v415, %v414
      %v419 = vpack.c.b16 %v417, %v416
      %vm420 = vcmask 261120
      %v422 = vsel %vm420, %v378, 0
      %v425 = vsel %vm420, %v379, 0
      %v428 = vsel %vm420, %v380, 0
      %v431 = vsel %vm420, %v381, 0
      %v434 = vsel %vm420, %v382, 0
      %v437 = vsel %vm420, %v383, 0
      %v440 = vsel %vm420, %v384, 0
      %v443 = vsel %vm420, %v385, 0
      %v446 = vsel %vm420, %v386, 0
      %v449 = vsel %vm420, %v387, 0
      %v452 = vsel %vm420, %v388, 0
      %v455 = vsel %vm420, %v389, 0
      %v458 = vsel %vm420, %v390, 0
      %v461 = vsel %vm420, %v391, 0
      %v464 = vsel %vm420, %v392, 0
      %v467 = vsel %vm420, %v393, 0
      %v470 = vsel %vm420, %v394, 0
      %v473 = vsel %vm420, %v395, 0
      %v476 = vsel %vm420, %v396, 0
      %v479 = vsel %vm420, %v397, 0
      %v482 = vsel %vm420, %v398, 0
      %v485 = vsel %vm420, %v399, 0
      %v488 = vsel %vm420, %v400, 0
      %v491 = vsel %vm420, %v401, 0
      %v494 = vsel %vm420, %v402, 0
      %v497 = vsel %vm420, %v403, 0
      %v500 = vsel %vm420, %v404, 0
      %v503 = vsel %vm420, %v405, 0
      %v506 = vsel %vm420, %v406, 0
      %v509 = vsel %vm420, %v407, 0
      %v512 = vsel %vm420, %v408, 0
      %v515 = vsel %vm420, %v409, 0
      %v518 = vsel %vm420, %v418, 0
      %v521 = vsel %vm420, %v419, 0
      %523 = vmatprep.subr.bf16.mxu0 0
      %524 = vmatpush1.bf16.xpose.msra.mxu0 %v518
      %525 = vmatprep.subr.bf16.mxu0 0
      %526 = vmatpush1.bf16.xpose.msra.mxu0 %v521
      %527 = vmatprep.subr.bf16.mxu0 0
      %528 = vmatpush1.bf16.xpose.msra.mxu0 0
      %529 = vmatprep.subr.bf16.mxu0 0
      %530 = vmatpush1.bf16.xpose.msra.mxu0 0
      %531 = vmatprep.subr.bf16.mxu0 0
      %532 = vmatpush1.bf16.xpose.msra.mxu0 0
      %533 = vmatprep.subr.bf16.mxu0 0
      %534 = vmatpush1.bf16.xpose.msra.mxu0 0
      %535 = vmatprep.subr.bf16.mxu0 0
      %536 = vmatpush1.bf16.xpose.msra.mxu0 0
      %537 = vmatprep.subr.bf16.mxu0 0
      %538 = vmatpush1.bf16.xpose.msra.mxu0 0
      %539 = vmatprep.subr.bf16.mxu0 0
      %540 = vmatpush1.bf16.xpose.msra.mxu0 0
      %541 = vmatprep.subr.bf16.mxu0 0
      %542 = vmatpush1.bf16.xpose.msra.mxu0 0
      %543 = vmatprep.subr.bf16.mxu0 0
      %544 = vmatpush1.bf16.xpose.msra.mxu0 0
      %545 = vmatprep.subr.bf16.mxu0 0
      %546 = vmatpush1.bf16.xpose.msra.mxu0 0
      %547 = vmatprep.subr.bf16.mxu0 0
      %548 = vmatpush1.bf16.xpose.msra.mxu0 0
      %549 = vmatprep.subr.bf16.mxu0 0
      %550 = vmatpush1.bf16.xpose.msra.mxu0 0
      %551 = vmatprep.subr.bf16.mxu0 0
      %552 = vmatpush1.bf16.xpose.msra.mxu0 0
      %553 = vmatprep.subr.bf16.mxu0 0
      %554 = vmatpush1.bf16.xpose.msra.mxu0 0
      %555 = vmatprep.mubr.bf16.mxu0 0
      %556 = vmatmul.mubr.bf16.gmra.mrb[0].mxu0 %v422
      %v557 = vpop.f32.mrb[0].mxu0
      %v558 = vadd.f32 %v248, %v557
      %v559 = vpop.f32.mrb[0].mxu0
      %v560 = vpop.f32.mrb[0].mxu0
      %v561 = vadd.f32 %v248, %v560
      %v562 = vpop.f32.mrb[0].mxu0
      %563 = vmatprep.mubr.bf16.mxu0 0
      %564 = vmatmul.mubr.bf16.gmra.mrb[0].mxu0 %v425
      %v565 = vpop.f32.mrb[0].mxu0
      %v566 = vadd.f32 %v248, %v565
      %v567 = vpop.f32.mrb[0].mxu0
      %v568 = vpop.f32.mrb[0].mxu0
      %v569 = vadd.f32 %v248, %v568
      %v570 = vpop.f32.mrb[0].mxu0
      %571 = vmatprep.mubr.bf16.mxu0 0
      %572 = vmatmul.mubr.bf16.gmra.mrb[0].mxu0 %v428
      %v573 = vpop.f32.mrb[0].mxu0
      %v574 = vadd.f32 %v248, %v573
      %v575 = vpop.f32.mrb[0].mxu0
      %v576 = vpop.f32.mrb[0].mxu0
      %v577 = vadd.f32 %v248, %v576
      %v578 = vpop.f32.mrb[0].mxu0
      %579 = vmatprep.mubr.bf16.mxu0 0
      %580 = vmatmul.mubr.bf16.gmra.mrb[0].mxu0 %v431
      %v581 = vpop.f32.mrb[0].mxu0
      %v582 = vadd.f32 %v248, %v581
      %v583 = vpop.f32.mrb[0].mxu0
      %v584 = vpop.f32.mrb[0].mxu0
      %v585 = vadd.f32 %v248, %v584
      %v586 = vpop.f32.mrb[0].mxu0
      %587 = vmatprep.mubr.bf16.mxu0 0
      %588 = vmatmul.mubr.bf16.gmra.mrb[0].mxu0 %v434
      %v589 = vpop.f32.mrb[0].mxu0
      %v590 = vadd.f32 %v248, %v589
      %v591 = vpop.f32.mrb[0].mxu0
      %v592 = vpop.f32.mrb[0].mxu0
      %v593 = vadd.f32 %v248, %v592
      %v594 = vpop.f32.mrb[0].mxu0
      %595 = vmatprep.mubr.bf16.mxu0 0
      %596 = vmatmul.mubr.bf16.gmra.mrb[0].mxu0 %v437
      %v597 = vpop.f32.mrb[0].mxu0
      %v598 = vadd.f32 %v248, %v597
      %v599 = vpop.f32.mrb[0].mxu0
      %v600 = vpop.f32.mrb[0].mxu0
      %v601 = vadd.f32 %v248, %v600
      %v602 = vpop.f32.mrb[0].mxu0
      %603 = vmatprep.mubr.bf16.mxu0 0
      %604 = vmatmul.mubr.bf16.gmra.mrb[0].mxu0 %v440
      %v605 = vpop.f32.mrb[0].mxu0
      %v606 = vadd.f32 %v248, %v605
      %v607 = vpop.f32.mrb[0].mxu0
      %v608 = vpop.f32.mrb[0].mxu0
      %v609 = vadd.f32 %v248, %v608
      %v610 = vpop.f32.mrb[0].mxu0
      %611 = vmatprep.mubr.bf16.mxu0 0
      %612 = vmatmul.mubr.bf16.gmra.mrb[0].mxu0 %v443
      %v613 = vpop.f32.mrb[0].mxu0
      %v614 = vadd.f32 %v248, %v613
      %v615 = vpop.f32.mrb[0].mxu0
      %v616 = vpop.f32.mrb[0].mxu0
      %v617 = vadd.f32 %v248, %v616
      %v618 = vpop.f32.mrb[0].mxu0
      %619 = vmatprep.mubr.bf16.mxu0 0
      %620 = vmatmul.mubr.bf16.gmra.mrb[0].mxu0 %v446
      %v621 = vpop.f32.mrb[0].mxu0
      %v622 = vadd.f32 %v248, %v621
      %v623 = vpop.f32.mrb[0].mxu0
      %v624 = vpop.f32.mrb[0].mxu0
      %v625 = vadd.f32 %v248, %v624
      %v626 = vpop.f32.mrb[0].mxu0
      %627 = vmatprep.mubr.bf16.mxu0 0
      %628 = vmatmul.mubr.bf16.gmra.mrb[0].mxu0 %v449
      %v629 = vpop.f32.mrb[0].mxu0
      %v630 = vadd.f32 %v248, %v629
      %v631 = vpop.f32.mrb[0].mxu0
      %v632 = vpop.f32.mrb[0].mxu0
      %v633 = vadd.f32 %v248, %v632
      %v634 = vpop.f32.mrb[0].mxu0
      %635 = vmatprep.mubr.bf16.mxu0 0
      %636 = vmatmul.mubr.bf16.gmra.mrb[0].mxu0 %v452
      %v637 = vpop.f32.mrb[0].mxu0
      %v638 = vadd.f32 %v248, %v637
      %v639 = vpop.f32.mrb[0].mxu0
      %v640 = vpop.f32.mrb[0].mxu0
      %v641 = vadd.f32 %v248, %v640
      %v642 = vpop.f32.mrb[0].mxu0
      %643 = vmatprep.mubr.bf16.mxu0 0
      %644 = vmatmul.mubr.bf16.gmra.mrb[0].mxu0 %v455
      %v645 = vpop.f32.mrb[0].mxu0
      %v646 = vadd.f32 %v248, %v645
      %v647 = vpop.f32.mrb[0].mxu0
      %v648 = vpop.f32.mrb[0].mxu0
      %v649 = vadd.f32 %v248, %v648
      %v650 = vpop.f32.mrb[0].mxu0
      %651 = vmatprep.mubr.bf16.mxu0 0
      %652 = vmatmul.mubr.bf16.gmra.mrb[0].mxu0 %v458
      %v653 = vpop.f32.mrb[0].mxu0
      %v654 = vadd.f32 %v248, %v653
      %v655 = vpop.f32.mrb[0].mxu0
      %v656 = vpop.f32.mrb[0].mxu0
      %v657 = vadd.f32 %v248, %v656
      %v658 = vpop.f32.mrb[0].mxu0
      %659 = vmatprep.mubr.bf16.mxu0 0
      %660 = vmatmul.mubr.bf16.gmra.mrb[0].mxu0 %v461
      %v661 = vpop.f32.mrb[0].mxu0
      %v662 = vadd.f32 %v248, %v661
      %v663 = vpop.f32.mrb[0].mxu0
      %v664 = vpop.f32.mrb[0].mxu0
      %v665 = vadd.f32 %v248, %v664
      %v666 = vpop.f32.mrb[0].mxu0
      %667 = vmatprep.mubr.bf16.mxu0 0
      %668 = vmatmul.mubr.bf16.gmra.mrb[0].mxu0 %v464
      %v669 = vpop.f32.mrb[0].mxu0
      %v670 = vadd.f32 %v248, %v669
      %v671 = vpop.f32.mrb[0].mxu0
      %v672 = vpop.f32.mrb[0].mxu0
      %v673 = vadd.f32 %v248, %v672
      %v674 = vpop.f32.mrb[0].mxu0
      %675 = vmatprep.mubr.bf16.mxu0 0
      %676 = vmatmul.mubr.bf16.gmra.mrb[0].mxu0 %v467
      %v677 = vpop.f32.mrb[0].mxu0
      %v678 = vadd.f32 %v248, %v677
      %v679 = vpop.f32.mrb[0].mxu0
      %v680 = vpop.f32.mrb[0].mxu0
      %v681 = vadd.f32 %v248, %v680
      %v682 = vpop.f32.mrb[0].mxu0
      %683 = vmatprep.mubr.bf16.mxu0 0
      %684 = vmatmul.mubr.bf16.gmra.mrb[0].mxu0 %v470
      %v685 = vpop.f32.mrb[0].mxu0
      %v686 = vadd.f32 %v248, %v685
      %v687 = vpop.f32.mrb[0].mxu0
      %v688 = vpop.f32.mrb[0].mxu0
      %v689 = vadd.f32 %v248, %v688
      %v690 = vpop.f32.mrb[0].mxu0
      %691 = vmatprep.mubr.bf16.mxu0 0
      %692 = vmatmul.mubr.bf16.gmra.mrb[0].mxu0 %v473
      %v693 = vpop.f32.mrb[0].mxu0
      %v694 = vadd.f32 %v248, %v693
      %v695 = vpop.f32.mrb[0].mxu0
      %v696 = vpop.f32.mrb[0].mxu0
      %v697 = vadd.f32 %v248, %v696
      %v698 = vpop.f32.mrb[0].mxu0
      %699 = vmatprep.mubr.bf16.mxu0 0
      %700 = vmatmul.mubr.bf16.gmra.mrb[0].mxu0 %v476
      %v701 = vpop.f32.mrb[0].mxu0
      %v702 = vadd.f32 %v248, %v701
      %v703 = vpop.f32.mrb[0].mxu0
      %v704 = vpop.f32.mrb[0].mxu0
      %v705 = vadd.f32 %v248, %v704
      %v706 = vpop.f32.mrb[0].mxu0
      %707 = vmatprep.mubr.bf16.mxu0 0
      %708 = vmatmul.mubr.bf16.gmra.mrb[0].mxu0 %v479
      %v709 = vpop.f32.mrb[0].mxu0
      %v710 = vadd.f32 %v248, %v709
      %v711 = vpop.f32.mrb[0].mxu0
      %v712 = vpop.f32.mrb[0].mxu0
      %v713 = vadd.f32 %v248, %v712
      %v714 = vpop.f32.mrb[0].mxu0
      %715 = vmatprep.mubr.bf16.mxu0 0
      %716 = vmatmul.mubr.bf16.gmra.mrb[0].mxu0 %v482
      %v717 = vpop.f32.mrb[0].mxu0
      %v718 = vadd.f32 %v248, %v717
      %v719 = vpop.f32.mrb[0].mxu0
      %v720 = vpop.f32.mrb[0].mxu0
      %v721 = vadd.f32 %v248, %v720
      %v722 = vpop.f32.mrb[0].mxu0
      %723 = vmatprep.mubr.bf16.mxu0 0
      %724 = vmatmul.mubr.bf16.gmra.mrb[0].mxu0 %v485
      %v725 = vpop.f32.mrb[0].mxu0
      %v726 = vadd.f32 %v248, %v725
      %v727 = vpop.f32.mrb[0].mxu0
      %v728 = vpop.f32.mrb[0].mxu0
      %v729 = vadd.f32 %v248, %v728
      %v730 = vpop.f32.mrb[0].mxu0
      %731 = vmatprep.mubr.bf16.mxu0 0
      %732 = vmatmul.mubr.bf16.gmra.mrb[0].mxu0 %v488
      %v733 = vpop.f32.mrb[0].mxu0
      %v734 = vadd.f32 %v248, %v733
      %v735 = vpop.f32.mrb[0].mxu0
      %v736 = vpop.f32.mrb[0].mxu0
      %v737 = vadd.f32 %v248, %v736
      %v738 = vpop.f32.mrb[0].mxu0
      %739 = vmatprep.mubr.bf16.mxu0 0
      %740 = vmatmul.mubr.bf16.gmra.mrb[0].mxu0 %v491
      %v741 = vpop.f32.mrb[0].mxu0
      %v742 = vadd.f32 %v248, %v741
      %v743 = vpop.f32.mrb[0].mxu0
      %v744 = vpop.f32.mrb[0].mxu0
      %v745 = vadd.f32 %v248, %v744
      %v746 = vpop.f32.mrb[0].mxu0
      %747 = vmatprep.mubr.bf16.mxu0 0
      %748 = vmatmul.mubr.bf16.gmra.mrb[0].mxu0 %v494
      %v749 = vpop.f32.mrb[0].mxu0
      %v750 = vadd.f32 %v248, %v749
      %v751 = vpop.f32.mrb[0].mxu0
      %v752 = vpop.f32.mrb[0].mxu0
      %v753 = vadd.f32 %v248, %v752
      %v754 = vpop.f32.mrb[0].mxu0
      %755 = vmatprep.mubr.bf16.mxu0 0
      %756 = vmatmul.mubr.bf16.gmra.mrb[0].mxu0 %v497
      %v757 = vpop.f32.mrb[0].mxu0
      %v758 = vadd.f32 %v248, %v757
      %v759 = vpop.f32.mrb[0].mxu0
      %v760 = vpop.f32.mrb[0].mxu0
      %v761 = vadd.f32 %v248, %v760
      %v762 = vpop.f32.mrb[0].mxu0
      %763 = vmatprep.mubr.bf16.mxu0 0
      %764 = vmatmul.mubr.bf16.gmra.mrb[0].mxu0 %v500
      %v765 = vpop.f32.mrb[0].mxu0
      %v766 = vadd.f32 %v248, %v765
      %v767 = vpop.f32.mrb[0].mxu0
      %v768 = vpop.f32.mrb[0].mxu0
      %v769 = vadd.f32 %v248, %v768
      %v770 = vpop.f32.mrb[0].mxu0
      %771 = vmatprep.mubr.bf16.mxu0 0
      %772 = vmatmul.mubr.bf16.gmra.mrb[0].mxu0 %v503
      %v773 = vpop.f32.mrb[0].mxu0
      %v774 = vadd.f32 %v248, %v773
      %v775 = vpop.f32.mrb[0].mxu0
      %v776 = vpop.f32.mrb[0].mxu0
      %v777 = vadd.f32 %v248, %v776
      %v778 = vpop.f32.mrb[0].mxu0
      %779 = vmatprep.mubr.bf16.mxu0 0
      %780 = vmatmul.mubr.bf16.gmra.mrb[0].mxu0 %v506
      %v781 = vpop.f32.mrb[0].mxu0
      %v782 = vadd.f32 %v248, %v781
      %v783 = vpop.f32.mrb[0].mxu0
      %v784 = vpop.f32.mrb[0].mxu0
      %v785 = vadd.f32 %v248, %v784
      %v786 = vpop.f32.mrb[0].mxu0
      %787 = vmatprep.mubr.bf16.mxu0 0
      %788 = vmatmul.mubr.bf16.gmra.mrb[0].mxu0 %v509
      %v789 = vpop.f32.mrb[0].mxu0
      %v790 = vadd.f32 %v248, %v789
      %v791 = vpop.f32.mrb[0].mxu0
      %v792 = vpop.f32.mrb[0].mxu0
      %v793 = vadd.f32 %v248, %v792
      %v794 = vpop.f32.mrb[0].mxu0
      %795 = vmatprep.mubr.bf16.mxu0 0
      %796 = vmatmul.mubr.bf16.gmra.mrb[0].mxu0 %v512
      %v797 = vpop.f32.mrb[0].mxu0
      %v798 = vadd.f32 %v248, %v797
      %v799 = vpop.f32.mrb[0].mxu0
      %v800 = vpop.f32.mrb[0].mxu0
      %v801 = vadd.f32 %v248, %v800
      %v802 = vpop.f32.mrb[0].mxu0
      %803 = vmatprep.mubr.bf16.mxu0 0
      %804 = vmatmul.mubr.bf16.gmra.mrb[0].mxu0 %v515
      %v805 = vpop.f32.mrb[0].mxu0
      %v806 = vadd.f32 %v248, %v805
      %v807 = vpop.f32.mrb[0].mxu0
      %v808 = vpop.f32.mrb[0].mxu0
      %v809 = vadd.f32 %v248, %v808
      %v810 = vpop.f32.mrb[0].mxu0
      %811 = vdwg.mxu0
      %v812 = vpack.c.bf16 %v561, %v558
      %v813 = vpack.c.bf16 %v569, %v566
      %v814 = vpack.c.bf16 %v577, %v574
      %v815 = vpack.c.bf16 %v585, %v582
      %v816 = vpack.c.bf16 %v593, %v590
      %v817 = vpack.c.bf16 %v601, %v598
      %v818 = vpack.c.bf16 %v609, %v606
      %v819 = vpack.c.bf16 %v617, %v614
      %v820 = vpack.c.bf16 %v625, %v622
      %v821 = vpack.c.bf16 %v633, %v630
      %v822 = vpack.c.bf16 %v641, %v638
      %v823 = vpack.c.bf16 %v649, %v646
      %v824 = vpack.c.bf16 %v657, %v654
      %v825 = vpack.c.bf16 %v665, %v662
      %v826 = vpack.c.bf16 %v673, %v670
      %v827 = vpack.c.bf16 %v681, %v678
      %v828 = vpack.c.bf16 %v689, %v686
      %v829 = vpack.c.bf16 %v697, %v694
      %v830 = vpack.c.bf16 %v705, %v702
      %v831 = vpack.c.bf16 %v713, %v710
      %v832 = vpack.c.bf16 %v721, %v718
      %v833 = vpack.c.bf16 %v729, %v726
      %v834 = vpack.c.bf16 %v737, %v734
      %v835 = vpack.c.bf16 %v745, %v742
      %v836 = vpack.c.bf16 %v753, %v750
      %v837 = vpack.c.bf16 %v761, %v758
      %v838 = vpack.c.bf16 %v769, %v766
      %v839 = vpack.c.bf16 %v777, %v774
      %v840 = vpack.c.bf16 %v785, %v782
      %v841 = vpack.c.bf16 %v793, %v790
      %v842 = vpack.c.bf16 %v801, %v798
      %v843 = vpack.c.bf16 %v809, %v806
      %v876 = vunpack.c.l.b16 %v812
      %v877 = vunpack.c.h.b16 %v812
      %v878 = vunpack.c.l.b16 %v813
      %v879 = vunpack.c.h.b16 %v813
      %v880 = vunpack.c.l.b16 %v814
      %v881 = vunpack.c.h.b16 %v814
      %v882 = vunpack.c.l.b16 %v815
      %v883 = vunpack.c.h.b16 %v815
      %v884 = vunpack.c.l.b16 %v816
      %v885 = vunpack.c.h.b16 %v816
      %v886 = vunpack.c.l.b16 %v817
      %v887 = vunpack.c.h.b16 %v817
      %v888 = vunpack.c.l.b16 %v818
      %v889 = vunpack.c.h.b16 %v818
      %v890 = vunpack.c.l.b16 %v819
      %v891 = vunpack.c.h.b16 %v819
      %v892 = vunpack.c.l.b16 %v820
      %v893 = vunpack.c.h.b16 %v820
      %v894 = vunpack.c.l.b16 %v821
      %v895 = vunpack.c.h.b16 %v821
      %v896 = vunpack.c.l.b16 %v822
      %v897 = vunpack.c.h.b16 %v822
      %v898 = vunpack.c.l.b16 %v823
      %v899 = vunpack.c.h.b16 %v823
      %v900 = vunpack.c.l.b16 %v824
      %v901 = vunpack.c.h.b16 %v824
      %v902 = vunpack.c.l.b16 %v825
      %v903 = vunpack.c.h.b16 %v825
      %v904 = vunpack.c.l.b16 %v826
      %v905 = vunpack.c.h.b16 %v826
      %v906 = vunpack.c.l.b16 %v827
      %v907 = vunpack.c.h.b16 %v827
      %v908 = vunpack.c.l.b16 %v828
      %v909 = vunpack.c.h.b16 %v828
      %v910 = vunpack.c.l.b16 %v829
      %v911 = vunpack.c.h.b16 %v829
      %v912 = vunpack.c.l.b16 %v830
      %v913 = vunpack.c.h.b16 %v830
      %v914 = vunpack.c.l.b16 %v831
      %v915 = vunpack.c.h.b16 %v831
      %v916 = vunpack.c.l.b16 %v832
      %v917 = vunpack.c.h.b16 %v832
      %v918 = vunpack.c.l.b16 %v833
      %v919 = vunpack.c.h.b16 %v833
      %v920 = vunpack.c.l.b16 %v834
      %v921 = vunpack.c.h.b16 %v834
      %v922 = vunpack.c.l.b16 %v835
      %v923 = vunpack.c.h.b16 %v835
      %v924 = vunpack.c.l.b16 %v836
      %v925 = vunpack.c.h.b16 %v836
      %v926 = vunpack.c.l.b16 %v837
      %v927 = vunpack.c.h.b16 %v837
      %v928 = vunpack.c.l.b16 %v838
      %v929 = vunpack.c.h.b16 %v838
      %v930 = vunpack.c.l.b16 %v839
      %v931 = vunpack.c.h.b16 %v839
      %v932 = vunpack.c.l.b16 %v840
      %v933 = vunpack.c.h.b16 %v840
      %v934 = vunpack.c.l.b16 %v841
      %v935 = vunpack.c.h.b16 %v841
      %v936 = vunpack.c.l.b16 %v842
      %v937 = vunpack.c.h.b16 %v842
      %v938 = vunpack.c.l.b16 %v843
      %v939 = vunpack.c.h.b16 %v843
      %v940 = vpack.c.b16 %v876, %v876
      %v941 = vpack.c.b16 %v877, %v877
      %v942 = vpack.c.b16 %v878, %v878
      %v943 = vpack.c.b16 %v879, %v879
      %v944 = vpack.c.b16 %v880, %v880
      %v945 = vpack.c.b16 %v881, %v881
      %v946 = vpack.c.b16 %v882, %v882
      %v947 = vpack.c.b16 %v883, %v883
      %v948 = vpack.c.b16 %v884, %v884
      %v949 = vpack.c.b16 %v885, %v885
      %v950 = vpack.c.b16 %v886, %v886
      %v951 = vpack.c.b16 %v887, %v887
      %v952 = vpack.c.b16 %v888, %v888
      %v953 = vpack.c.b16 %v889, %v889
      %v954 = vpack.c.b16 %v890, %v890
      %v955 = vpack.c.b16 %v891, %v891
      %v956 = vpack.c.b16 %v892, %v892
      %v957 = vpack.c.b16 %v893, %v893
      %v958 = vpack.c.b16 %v894, %v894
      %v959 = vpack.c.b16 %v895, %v895
      %v960 = vpack.c.b16 %v896, %v896
      %v961 = vpack.c.b16 %v897, %v897
      %v962 = vpack.c.b16 %v898, %v898
      %v963 = vpack.c.b16 %v899, %v899
      %v964 = vpack.c.b16 %v900, %v900
      %v965 = vpack.c.b16 %v901, %v901
      %v966 = vpack.c.b16 %v902, %v902
      %v967 = vpack.c.b16 %v903, %v903
      %v968 = vpack.c.b16 %v904, %v904
      %v969 = vpack.c.b16 %v905, %v905
      %v970 = vpack.c.b16 %v906, %v906
      %v971 = vpack.c.b16 %v907, %v907
      %v972 = vpack.c.b16 %v908, %v908
      %v973 = vpack.c.b16 %v909, %v909
      %v974 = vpack.c.b16 %v910, %v910
      %v975 = vpack.c.b16 %v911, %v911
      %v976 = vpack.c.b16 %v912, %v912
      %v977 = vpack.c.b16 %v913, %v913
      %v978 = vpack.c.b16 %v914, %v914
      %v979 = vpack.c.b16 %v915, %v915
      %v980 = vpack.c.b16 %v916, %v916
      %v981 = vpack.c.b16 %v917, %v917
      %v982 = vpack.c.b16 %v918, %v918
      %v983 = vpack.c.b16 %v919, %v919
      %v984 = vpack.c.b16 %v920, %v920
      %v985 = vpack.c.b16 %v921, %v921
      %v986 = vpack.c.b16 %v922, %v922
      %v987 = vpack.c.b16 %v923, %v923
      %v988 = vpack.c.b16 %v924, %v924
      %v989 = vpack.c.b16 %v925, %v925
      %v990 = vpack.c.b16 %v926, %v926
      %v991 = vpack.c.b16 %v927, %v927
      %v992 = vpack.c.b16 %v928, %v928
      %v993 = vpack.c.b16 %v929, %v929
      %v994 = vpack.c.b16 %v930, %v930
      %v995 = vpack.c.b16 %v931, %v931
      %v996 = vpack.c.b16 %v932, %v932
      %v997 = vpack.c.b16 %v933, %v933
      %v998 = vpack.c.b16 %v934, %v934
      %v999 = vpack.c.b16 %v935, %v935
      %v1000 = vpack.c.b16 %v936, %v936
      %v1001 = vpack.c.b16 %v937, %v937
      %v1002 = vpack.c.b16 %v938, %v938
      %v1003 = vpack.c.b16 %v939, %v939
      %vm1068 = vcmask 257024
      %1069 = vst.msk [vmem:[%s172] sm:$0xf] %vm1068, %v940
      %1070 = vst.msk [vmem:[%s172 + $0x4] sm:$0xf] %vm1068, %v941
      %1071 = vst.msk [vmem:[%s172 + $0x8] sm:$0xf] %vm1068, %v942
      %1072 = vst.msk [vmem:[%s172 + $0xc] sm:$0xf] %vm1068, %v943
      %1073 = vst.msk [vmem:[%s172 + $0x10] sm:$0xf] %vm1068, %v944
      %1074 = vst.msk [vmem:[%s172 + $0x14] sm:$0xf] %vm1068, %v945
      %1075 = vst.msk [vmem:[%s172 + $0x18] sm:$0xf] %vm1068, %v946
      %1076 = vst.msk [vmem:[%s172 + $0x1c] sm:$0xf] %vm1068, %v947
      %1077 = vst.msk [vmem:[%s172 + $0x20] sm:$0xf] %vm1068, %v948
      %1078 = vst.msk [vmem:[%s172 + $0x24] sm:$0xf] %vm1068, %v949
      %1079 = vst.msk [vmem:[%s172 + $0x28] sm:$0xf] %vm1068, %v950
      %1080 = vst.msk [vmem:[%s172 + $0x2c] sm:$0xf] %vm1068, %v951
      %1081 = vst.msk [vmem:[%s172 + $0x30] sm:$0xf] %vm1068, %v952
      %1082 = vst.msk [vmem:[%s172 + $0x34] sm:$0xf] %vm1068, %v953
      %1083 = vst.msk [vmem:[%s172 + $0x38] sm:$0xf] %vm1068, %v954
      %1084 = vst.msk [vmem:[%s172 + $0x3c] sm:$0xf] %vm1068, %v955
      %1085 = vst.msk [vmem:[%s172 + $0x40] sm:$0xf] %vm1068, %v956
      %1086 = vst.msk [vmem:[%s172 + $0x44] sm:$0xf] %vm1068, %v957
      %1087 = vst.msk [vmem:[%s172 + $0x48] sm:$0xf] %vm1068, %v958
      %1088 = vst.msk [vmem:[%s172 + $0x4c] sm:$0xf] %vm1068, %v959
      %1089 = vst.msk [vmem:[%s172 + $0x50] sm:$0xf] %vm1068, %v960
      %1090 = vst.msk [vmem:[%s172 + $0x54] sm:$0xf] %vm1068, %v961
      %1091 = vst.msk [vmem:[%s172 + $0x58] sm:$0xf] %vm1068, %v962
      %1092 = vst.msk [vmem:[%s172 + $0x5c] sm:$0xf] %vm1068, %v963
      %1093 = vst.msk [vmem:[%s172 + $0x60] sm:$0xf] %vm1068, %v964
      %1094 = vst.msk [vmem:[%s172 + $0x64] sm:$0xf] %vm1068, %v965
      %1095 = vst.msk [vmem:[%s172 + $0x68] sm:$0xf] %vm1068, %v966
      %1096 = vst.msk [vmem:[%s172 + $0x6c] sm:$0xf] %vm1068, %v967
      %1097 = vst.msk [vmem:[%s172 + $0x70] sm:$0xf] %vm1068, %v968
      %1098 = vst.msk [vmem:[%s172 + $0x74] sm:$0xf] %vm1068, %v969
      %1099 = vst.msk [vmem:[%s172 + $0x78] sm:$0xf] %vm1068, %v970
      %1100 = vst.msk [vmem:[%s172 + $0x7c] sm:$0xf] %vm1068, %v971
      %1101 = vst.msk [vmem:[%s172 + $0x80] sm:$0xf] %vm1068, %v972
      %1102 = vst.msk [vmem:[%s172 + $0x84] sm:$0xf] %vm1068, %v973
      %1103 = vst.msk [vmem:[%s172 + $0x88] sm:$0xf] %vm1068, %v974
      %1104 = vst.msk [vmem:[%s172 + $0x8c] sm:$0xf] %vm1068, %v975
      %1105 = vst.msk [vmem:[%s172 + $0x90] sm:$0xf] %vm1068, %v976
      %1106 = vst.msk [vmem:[%s172 + $0x94] sm:$0xf] %vm1068, %v977
      %1107 = vst.msk [vmem:[%s172 + $0x98] sm:$0xf] %vm1068, %v978
      %1108 = vst.msk [vmem:[%s172 + $0x9c] sm:$0xf] %vm1068, %v979
      %1109 = vst.msk [vmem:[%s172 + $0xa0] sm:$0xf] %vm1068, %v980
      %1110 = vst.msk [vmem:[%s172 + $0xa4] sm:$0xf] %vm1068, %v981
      %1111 = vst.msk [vmem:[%s172 + $0xa8] sm:$0xf] %vm1068, %v982
      %1112 = vst.msk [vmem:[%s172 + $0xac] sm:$0xf] %vm1068, %v983
      %1113 = vst.msk [vmem:[%s172 + $0xb0] sm:$0xf] %vm1068, %v984
      %1114 = vst.msk [vmem:[%s172 + $0xb4] sm:$0xf] %vm1068, %v985
      %1115 = vst.msk [vmem:[%s172 + $0xb8] sm:$0xf] %vm1068, %v986
      %1116 = vst.msk [vmem:[%s172 + $0xbc] sm:$0xf] %vm1068, %v987
      %1117 = vst.msk [vmem:[%s172 + $0xc0] sm:$0xf] %vm1068, %v988
      %1118 = vst.msk [vmem:[%s172 + $0xc4] sm:$0xf] %vm1068, %v989
      %1119 = vst.msk [vmem:[%s172 + $0xc8] sm:$0xf] %vm1068, %v990
      %1120 = vst.msk [vmem:[%s172 + $0xcc] sm:$0xf] %vm1068, %v991
      %1121 = vst.msk [vmem:[%s172 + $0xd0] sm:$0xf] %vm1068, %v992
      %1122 = vst.msk [vmem:[%s172 + $0xd4] sm:$0xf] %vm1068, %v993
      %1123 = vst.msk [vmem:[%s172 + $0xd8] sm:$0xf] %vm1068, %v994
      %1124 = vst.msk [vmem:[%s172 + $0xdc] sm:$0xf] %vm1068, %v995
      %1125 = vst.msk [vmem:[%s172 + $0xe0] sm:$0xf] %vm1068, %v996
      %1126 = vst.msk [vmem:[%s172 + $0xe4] sm:$0xf] %vm1068, %v997
      %1127 = vst.msk [vmem:[%s172 + $0xe8] sm:$0xf] %vm1068, %v998
      %1128 = vst.msk [vmem:[%s172 + $0xec] sm:$0xf] %vm1068, %v999
      %1129 = vst.msk [vmem:[%s172 + $0xf0] sm:$0xf] %vm1068, %v1000
      %1130 = vst.msk [vmem:[%s172 + $0xf4] sm:$0xf] %vm1068, %v1001
      %1131 = vst.msk [vmem:[%s172 + $0xf8] sm:$0xf] %vm1068, %v1002
      %1132 = vst.msk [vmem:[%s172 + $0xfc] sm:$0xf] %vm1068, %v1003
      %s1133 = smul.u32 64, %s14
      %p1134 = scmp.lt.s32.totalorder %s1133, 127
      %s1135 = scalar_select %p1134, %s1133, 127
      %s1136 = smul.addr %s1135, 4
      %s1137 = scalar_lea.vmem %s3, %s1136
      // Predicated region
      $region33: #{tpu_custom_call.1} parent=31 // pred_check
        %p1138 = pneg %p100
      $region34: #{tpu_custom_call.1} parent=31 // pred_check_branch
        %1140 = sbr.rel (%p1138) target = $region36
      $region35: #{tpu_custom_call.1} parent=31 // pred_region
        %s1141 = smul.u32 64, %s14
      $region36: #{tpu_custom_call.1} parent=31 // pred_fallthru
        _
    $region32: #{tpu_custom_call.1} parent=5 // pred_fallthru
      _
    %p1142 = scmp.le.s32.totalorder 2, %s9
    // Predicated region
    $region37: #{tpu_custom_call.1} parent=5 // pred_check
      %p1143 = pneg %p1142
    $region38: #{tpu_custom_call.1} parent=5 // pred_check_branch
      %1145 = sbr.rel (%p1143) target = $region40
    $region39: #{tpu_custom_call.1} parent=5 // pred_region
      %s1146 = ssub.s32 %s9, 2
      // Predicated region
      $region41: #{tpu_custom_call.1} parent=39 // pred_check
        %p1147 = pneg %p106
      $region42: #{tpu_custom_call.1} parent=39 // pred_check_branch
        %1149 = sbr.rel (%p1147) target = $region44
      $region43: #{tpu_custom_call.1} parent=39 // pred_region
        %s1150 = smul.u32 64, %s15
        %p1151 = scmp.lt.s32.totalorder %s1150, 127
        %s1152 = scalar_select %p1151, %s1150, 127
        %s1153 = smul.addr %s1152, 4
        %s1154 = scalar_lea.vmem %s3, %s1153
      $region44: #{tpu_custom_call.1} parent=39 // pred_fallthru
        _
    $region40: #{tpu_custom_call.1} parent=5 // pred_fallthru
      _
  $region6: #{tpu_custom_call.1} parent=0 // loop_footer
    %s13 = sadd.s32 1, %s9
  $region7: #{tpu_custom_call.1} parent=0 // loop_footer_branch
    %8 = sbr.rel target = $region3
  $region8: #{tpu_custom_call.1} parent=0 // loop_exit
    _

</llo_original>
